<compile_context>
chip_gen: v6e
topology: v6e:2x2x1
jax: 0.10.0
libtpu: 0.0.40
codegen_flags: <defaults>
</compile_context>

<pallas_src>
import functools

import jax
import jax.numpy as jnp
from jax import lax
from jax.experimental import pallas as pl
from jax.experimental.pallas import tpu as pltpu


_NEG_BIG = -1e30            # finite "-inf" for padded key columns (avoids inf/nan paths)
_LEAKY_SLOPE = 0.01         # F.leaky_relu default
_HIGHEST = lax.Precision.HIGHEST


def _round_up(x, m):
    return ((x + m - 1) // m) * m


def _pick_tile(n, candidates):
    for c in candidates:
        if c <= n and n % c == 0:
            return c
    return n


def _gat_attn_kernel(s1_ref, s2_ref, wh_ref, out_ref, m_sc, l_sc, *, tj, wh_resident):
    """One (i-tile, j-tile) grid step of online-softmax GAT attention.

    s1_ref : (ti, 1)            a1 . Wh[i]   (query-node score column)
    s2_ref : (1, tj)            a2 . Wh[j]   (key-node score row; padded cols = -1e30)
    wh_ref : (Np, F) or (tj, F) projected features (VMEM-resident or streamed)
    out_ref: (ti, F) f32        output block; resident across j -> used as accumulator
    m_sc, l_sc : (ti, 1) f32    online-softmax running max / running sum
    """
    j = pl.program_id(1)

    @pl.when(j == 0)
    def _():
        m_sc[...] = jnp.full_like(m_sc, -jnp.inf)
        l_sc[...] = jnp.zeros_like(l_sc)
        out_ref[...] = jnp.zeros_like(out_ref)

    # e[i, j] = leaky_relu(a1.Wh[i] + a2.Wh[j])  -- pure VPU broadcast add; scores
    # arrive pre-reduced from the wrapper (no 1-wide MXU matmuls in-kernel).
    e = s1_ref[...] + s2_ref[...]                       # (ti, tj) f32
    e = jnp.maximum(e, _LEAKY_SLOPE * e)                # leaky_relu: one vmul + one vmax

    # Online softmax over the j (dim=1) axis.
    m_prev = m_sc[...]
    m_new = jnp.maximum(m_prev, jnp.max(e, axis=1, keepdims=True))
    alpha = jnp.exp(m_prev - m_new)                     # (ti, 1)
    p = jnp.exp(e - m_new)                              # (ti, tj); padded cols -> exactly 0
    l_sc[...] = alpha * l_sc[...] + jnp.sum(p, axis=1, keepdims=True)

    if wh_resident:
        start = pl.multiple_of(j * tj, tj)
        wh = wh_ref[pl.ds(start, tj), :]                # slice j-tile out of resident Wh
    else:
        wh = wh_ref[...]                                # streamed (tj, F) tile

    # Accumulate straight into the resident f32 output block (no acc scratch,
    # no final copy, one fewer per-step VMEM store stream).
    out_ref[...] = alpha * out_ref[...] + jnp.dot(
        p.astype(wh.dtype), wh, preferred_element_type=jnp.float32)
    m_sc[...] = m_new

    @pl.when(j == pl.num_programs(1) - 1)
    def _():
        # Exact reciprocal (review flagged approx vrcp as the main parity risk).
        out_ref[...] = out_ref[...] * pl.reciprocal(l_sc[...], approx=False)


def gat_layer(h, adj, W_weight, a_weight, *, block_i=None, block_j=None,
              matmul_dtype=jnp.bfloat16):
    """Pallas equivalent of GATLayer.forward.

    h        : (N, in_features) float32
    adj      : (N, N)                       -- unused (matches the reference forward)
    W_weight : (out_features, in_features)  -- nn.Linear weight
    a_weight : (1, 2*out_features)          -- nn.Linear weight
    matmul_dtype : dtype of the Wh / p operands of the PV matmul (f32 accumulation
                   is always kept).  Default bf16 (2x MXU / half the HBM bytes);
                   pass jnp.float32 for strict parity.
    returns  : (N, 1, out_features) float32
    """
    del adj  # not used by the reference forward pass
    N = h.shape[0]
    F_out = W_weight.shape[0]

    h = h.astype(jnp.float32)
    # Hoisted projection + attention-vector reduction, done once in true f32
    # (Precision.HIGHEST avoids XLA's default bf16-truncated f32 matmuls).
    Wh = jnp.dot(h, W_weight.T.astype(jnp.float32),
                 preferred_element_type=jnp.float32, precision=_HIGHEST)    # (N, F)
    a12 = jnp.stack([a_weight[0, :F_out], a_weight[0, F_out:]],
                    axis=1).astype(jnp.float32)                             # (F, 2)
    s = jnp.dot(Wh, a12, preferred_element_type=jnp.float32,
                precision=_HIGHEST)                                         # (N, 2)
    s1 = s[:, 0:1]            # (N, 1) query-node score (column layout)
    s2 = s[:, 1:2].T          # (1, N) key-node score (row layout -> no transpose in-kernel)

    wh_in = Wh.astype(matmul_dtype)
    elt = jnp.dtype(matmul_dtype).itemsize

    # Pad N to a multiple of 128: (8,128)-aligned tiles, lane-dense stores, real grid.
    # Padded key columns -> huge negative score (zero softmax weight); padded query
    # rows compute harmless finite garbage and are sliced off.
    Np = max(_round_up(N, 128), 128)
    pad = Np - N
    if pad:
        s1 = jnp.pad(s1, ((0, pad), (0, 0)))
        s2 = jnp.pad(s2, ((0, 0), (0, pad)), constant_values=_NEG_BIG)
        wh_in = jnp.pad(wh_in, ((0, pad), (0, 0)))

    ti = block_i if block_i is not None else _pick_tile(Np, (512, 256, 128))
    tj = block_j if block_j is not None else _pick_tile(Np, (1024, 512, 256, 128))
    assert Np % ti == 0 and Np % tj == 0
    assert ti == Np or ti % 8 == 0
    assert tj == Np or tj % 128 == 0
    grid = (Np // ti, Np // tj)

    # Keep Wh VMEM-resident across the whole grid when it fits the budget: removes
    # the per-(i,j) Wh re-fetch (factor Np/ti of HBM traffic) and makes the inner
    # j loop DMA-free.  Budget is gated on the chip's VMEM capacity (v7x: 64 MiB/TC).
    wh_bytes = Np * F_out * elt
    try:
        vmem_cap = int(pltpu.get_tpu_info().vmem_capacity_bytes)
    except Exception:
        vmem_cap = 64 * 2**20
    wh_resident = 2 * wh_bytes <= vmem_cap // 4     # 2x: default double-buffering

    if wh_resident:
        wh_spec = pl.BlockSpec((Np, F_out), lambda i, j: (0, 0))
        wh_block_bytes = wh_bytes
    else:
        wh_spec = pl.BlockSpec((tj, F_out), lambda i, j: (j, 0))
        wh_block_bytes = tj * F_out * elt

    # VMEM budget: double-buffered inputs + resident f32 output block + scratch +
    # the materialized (ti, tj) e/p/alpha intermediates.
    live_bytes = (2 * (ti * 4 + tj * 4 + wh_block_bytes)
                  + 2 * ti * F_out * 4
                  + 2 * ti * 4
                  + 4 * ti * tj * 4)
    vmem_limit = int(min(max(2 * live_bytes, 16 * 2**20), 48 * 2**20))

    cost = pl.CostEstimate(
        flops=2 * Np * Np * F_out + 8 * Np * Np,
        transcendentals=Np * Np + Np * grid[1],
        bytes_accessed=(grid[1] * Np * 4 + grid[0] * Np * 4
                        + (1 if wh_resident else grid[0]) * Np * F_out * elt
                        + Np * F_out * 4),
    )

    kernel = functools.partial(_gat_attn_kernel, tj=tj, wh_resident=wh_resident)

    grid_spec = pltpu.PrefetchScalarGridSpec(
        num_scalar_prefetch=0,
        grid=grid,
        in_specs=[
            pl.BlockSpec((ti, 1), lambda i, j: (i, 0)),      # s1: per i-tile
            pl.BlockSpec((1, tj), lambda i, j: (0, j)),      # s2: per j-tile (row)
            wh_spec,                                          # Wh: resident or streamed
        ],
        out_specs=pl.BlockSpec((ti, F_out), lambda i, j: (i, 0)),
        scratch_shapes=[
            pltpu.VMEM((ti, 1), jnp.float32),   # running max m
            pltpu.VMEM((ti, 1), jnp.float32),   # running sum l
        ],
    )

    # TODO(synk): on v7x (2 TensorCores) try pltpu.CORE_PARALLEL on axis 0; plain
    # "parallel" is kept here since it is safe on all generations.
    # Note: the "widen lanes by batching heads" review item does not apply — this
    # module has a single head; F_out is lane-dense when out_features >= 128.
    out = pl.pallas_call(
        kernel,
        out_shape=jax.ShapeDtypeStruct((Np, F_out), jnp.float32),
        grid_spec=grid_spec,
        compiler_params=pltpu.CompilerParams(
            dimension_semantics=("parallel", "arbitrary"),
            vmem_limit_bytes=vmem_limit,
        ),
        cost_estimate=cost,
    )(s1, s2, wh_in)

    # Lane-dense (Np, F) store in-kernel; slicing/reshaping to (N, 1, F) is free here.
    return out[:N].reshape(N, 1, F_out)


def _reference(h, W_weight, a_weight):
    """Pure-JAX reference mirroring the PyTorch code (full-precision matmuls)."""
    N = h.shape[0]
    F_out = W_weight.shape[0]
    Wh = jnp.dot(h, W_weight.T, precision=_HIGHEST)                       # (N, F)
    rep_chunks = jnp.repeat(Wh, N, axis=0)                                # repeat_interleave
    rep_alt = jnp.tile(Wh, (N, 1))                                        # repeat
    a_input = jnp.concatenate([rep_chunks, rep_alt], axis=1).reshape(N, N, 2 * F_out)
    e = jnp.einsum("ijk,k->ij", a_input, a_weight[0], precision=_HIGHEST)  # (N, N)
    e = jnp.where(e > 0, e, _LEAKY_SLOPE * e)[..., None]                   # (N, N, 1)
    attn = jax.nn.softmax(e, axis=1)
    h_prime = jnp.einsum("ion,nf->iof", jnp.transpose(attn, (0, 2, 1)), Wh,
                         precision=_HIGHEST)
    return h_prime                                                         # (N, 1, F)


def _make_inputs(key, N, in_features, out_features):
    k_h, k_adj, k_w, k_a = jax.random.split(key, 4)
    h = jax.random.normal(k_h, (N, in_features), dtype=jnp.float32)
    adj = (jax.random.uniform(k_adj, (N, N)) > 0.5).astype(jnp.float32)   # unused
    w_bound = 1.0 / (in_features ** 0.5)
    a_bound = 1.0 / ((2 * out_features) ** 0.5)
    W_weight = jax.random.uniform(k_w, (out_features, in_features),
                                  minval=-w_bound, maxval=w_bound, dtype=jnp.float32)
    a_weight = jax.random.uniform(k_a, (1, 2 * out_features),
                                  minval=-a_bound, maxval=a_bound, dtype=jnp.float32)
    return h, adj, W_weight, a_weight


if __name__ == "__main__":
    key = jax.random.PRNGKey(0)
    k1, k2 = jax.random.split(key)

    # Test 1: tiny graph (module's intended small usage), f32 operands, 1x1 grid
    # after padding N=8 -> 128 (exercises padded query rows and key columns).
    N1, in1, out1 = 8, 16, 32
    h1, adj1, Ww1, aw1 = _make_inputs(k1, N1, in1, out1)
    got1 = jax.block_until_ready(
        gat_layer(h1, adj1, Ww1, aw1, matmul_dtype=jnp.float32))
    ref1 = _reference(h1, Ww1, aw1)
    assert got1.shape == (N1, 1, out1)
    err1 = float(jnp.max(jnp.abs(got1 - ref1)))
    assert bool(jnp.allclose(got1, ref1, atol=1e-2, rtol=1e-2)), err1

    # Test 2: N not a multiple of 128 (padding path), 2x2 grid -> multi-j
    # online-softmax accumulation, default bf16 PV operands with f32 accumulation.
    N2, in2, out2 = 200, 64, 128
    h2, adj2, Ww2, aw2 = _make_inputs(k2, N2, in2, out2)
    got2 = jax.block_until_ready(
        gat_layer(h2, adj2, Ww2, aw2, block_i=128, block_j=128))
    ref2 = _reference(h2, Ww2, aw2)
    assert got2.shape == (N2, 1, out2)
    err2 = float(jnp.max(jnp.abs(got2 - ref2)))
    assert bool(jnp.allclose(got2, ref2, atol=2e-2, rtol=2e-2)), err2

    print("KERNEL_OK")
</pallas_src>

<mosaic_0001>
module attributes {stable_mosaic.version = 11 : i64} {
  func.func @_gat_attn_kernel(%arg0: i32, %arg1: i32, %arg2: memref<128x1xf32, #tpu.memory_space<vmem>>, %arg3: memref<1x128xf32, #tpu.memory_space<vmem>>, %arg4: memref<128x32xf32, #tpu.memory_space<vmem>>, %arg5: memref<128x32xf32, #tpu.memory_space<vmem>>, %arg6: memref<128x1xf32, #tpu.memory_space<vmem>>, %arg7: memref<128x1xf32, #tpu.memory_space<vmem>>) attributes {dimension_semantics = [#tpu.dimension_semantics<parallel>, #tpu.dimension_semantics<arbitrary>], iteration_bounds = array<i64: 1, 1>, scalar_prefetch = 0 : i64, scratch_operands = 2 : i64, tpu.core_type = #tpu.core_type<tc>, window_params = [{transform_indices = @transform_0, window_bounds = array<i64: 128, 1>}, {transform_indices = @transform_1, window_bounds = array<i64: 1, 128>}, {pipeline_mode = #tpu.pipeline_mode<synchronous>, transform_indices = @transform_2, window_bounds = array<i64: 128, 32>}, {transform_indices = @transform_3, window_bounds = array<i64: 128, 32>}]} {
    %c0_i32 = arith.constant 0 : i32
    %0 = arith.cmpi eq, %arg1, %c0_i32 : i32
    %1 = arith.extui %0 : i1 to i32
    %c0_i32_0 = arith.constant 0 : i32
    %2 = arith.cmpi ne, %1, %c0_i32_0 : i32
    scf.if %2 {
      %cst_22 = arith.constant 0xFF800000 : f32
      %40 = vector.broadcast %cst_22 : f32 to vector<128x1xf32>
      %c0_23 = arith.constant 0 : index
      %c0_24 = arith.constant 0 : index
      %41 = vector.load %arg6[%c0_23, %c0_24] : memref<128x1xf32, #tpu.memory_space<vmem>>, vector<128x1xf32>
      tpu.vector_store %arg6[%c0_23, %c0_24], %40 {strides = array<i32>} : memref<128x1xf32, #tpu.memory_space<vmem>>, vector<128x1xf32>,
      %cst_25 = arith.constant 0.000000e+00 : f32
      %42 = vector.broadcast %cst_25 : f32 to vector<128x1xf32>
      %c0_26 = arith.constant 0 : index
      %c0_27 = arith.constant 0 : index
      %43 = vector.load %arg7[%c0_26, %c0_27] : memref<128x1xf32, #tpu.memory_space<vmem>>, vector<128x1xf32>
      tpu.vector_store %arg7[%c0_26, %c0_27], %42 {strides = array<i32>} : memref<128x1xf32, #tpu.memory_space<vmem>>, vector<128x1xf32>,
      %cst_28 = arith.constant 0.000000e+00 : f32
      %44 = vector.broadcast %cst_28 : f32 to vector<128x32xf32>
      %c0_29 = arith.constant 0 : index
      %c0_30 = arith.constant 0 : index
      %45 = vector.load %arg5[%c0_29, %c0_30] : memref<128x32xf32, #tpu.memory_space<vmem>>, vector<128x32xf32>
      tpu.vector_store %arg5[%c0_29, %c0_30], %44 {strides = array<i32>} : memref<128x32xf32, #tpu.memory_space<vmem>>, vector<128x32xf32>,
    } else {
    }
    %c0 = arith.constant 0 : index
    %c0_1 = arith.constant 0 : index
    %3 = vector.load %arg2[%c0, %c0_1] : memref<128x1xf32, #tpu.memory_space<vmem>>, vector<128x1xf32>
    %c0_2 = arith.constant 0 : index
    %c0_3 = arith.constant 0 : index
    %4 = vector.load %arg3[%c0_2, %c0_3] : memref<1x128xf32, #tpu.memory_space<vmem>>, vector<1x128xf32>
    %5 = vector.broadcast %3 : vector<128x1xf32> to vector<128x128xf32>
    %6 = vector.broadcast %4 : vector<1x128xf32> to vector<128x128xf32>
    %7 = arith.addf %5, %6 : vector<128x128xf32>
    %cst = arith.constant 0.00999999977 : f32
    %8 = vector.broadcast %cst : f32 to vector<128x128xf32>
    %9 = arith.mulf %8, %7 : vector<128x128xf32>
    %10 = arith.maximumf %7, %9 : vector<128x128xf32>
    %c0_4 = arith.constant 0 : index
    %c0_5 = arith.constant 0 : index
    %11 = vector.load %arg6[%c0_4, %c0_5] : memref<128x1xf32, #tpu.memory_space<vmem>>, vector<128x1xf32>
    %cst_6 = arith.constant dense<0xFF800000> : vector<128xf32>
    %12 = vector.multi_reduction <maximumf>, %10, %cst_6 [1] : vector<128x128xf32> to vector<128xf32>
    %13 = vector.shape_cast %12 : vector<128xf32> to vector<128x1xf32>
    %14 = arith.maximumf %11, %13 : vector<128x1xf32>
    %15 = arith.subf %11, %14 : vector<128x1xf32>
    %16 = math.exp %15 : vector<128x1xf32>
    %17 = vector.broadcast %14 : vector<128x1xf32> to vector<128x128xf32>
    %18 = arith.subf %10, %17 : vector<128x128xf32>
    %19 = math.exp %18 : vector<128x128xf32>
    %c0_7 = arith.constant 0 : index
    %c0_8 = arith.constant 0 : index
    %20 = vector.load %arg7[%c0_7, %c0_8] : memref<128x1xf32, #tpu.memory_space<vmem>>, vector<128x1xf32>
    %21 = arith.mulf %16, %20 : vector<128x1xf32>
    %cst_9 = arith.constant dense<0.000000e+00> : vector<128xf32>
    %22 = vector.multi_reduction <add>, %19, %cst_9 [1] : vector<128x128xf32> to vector<128xf32>
    %23 = vector.shape_cast %22 : vector<128xf32> to vector<128x1xf32>
    %24 = arith.addf %21, %23 : vector<128x1xf32>
    %c0_10 = arith.constant 0 : index
    %c0_11 = arith.constant 0 : index
    %25 = vector.load %arg7[%c0_10, %c0_11] : memref<128x1xf32, #tpu.memory_space<vmem>>, vector<128x1xf32>
    tpu.vector_store %arg7[%c0_10, %c0_11], %24 {strides = array<i32>} : memref<128x1xf32, #tpu.memory_space<vmem>>, vector<128x1xf32>,
    %c128_i32 = arith.constant 128 : i32
    %26 = arith.muli %arg1, %c128_i32 : i32
    %27 = tpu.assume_multiple %26, 128 : i32
    %28 = arith.index_cast %27 : i32 to index
    %c0_12 = arith.constant 0 : index
    %29 = vector.load %arg4[%28, %c0_12] : memref<128x32xf32, #tpu.memory_space<vmem>>, vector<128x32xf32>
    %c0_13 = arith.constant 0 : index
    %c0_14 = arith.constant 0 : index
    %30 = vector.load %arg5[%c0_13, %c0_14] : memref<128x32xf32, #tpu.memory_space<vmem>>, vector<128x32xf32>
    %31 = vector.broadcast %16 : vector<128x1xf32> to vector<128x32xf32>
    %32 = arith.mulf %31, %30 : vector<128x32xf32>
    %cst_15 = arith.constant dense<0.000000e+00> : vector<128x32xf32>
    %33 = tpu.matmul %19, %29, %cst_15 {dimension_numbers = #tpu.dot_dimension_numbers<[1], [0], [0], [1], [0, 0, 1, 1], [], []>} : vector<128x128xf32>, vector<128x32xf32>, vector<128x32xf32> -> vector<128x32xf32>
    %34 = arith.addf %32, %33 : vector<128x32xf32>
    %c0_16 = arith.constant 0 : index
    %c0_17 = arith.constant 0 : index
    %35 = vector.load %arg5[%c0_16, %c0_17] : memref<128x32xf32, #tpu.memory_space<vmem>>, vector<128x32xf32>
    tpu.vector_store %arg5[%c0_16, %c0_17], %34 {strides = array<i32>} : memref<128x32xf32, #tpu.memory_space<vmem>>, vector<128x32xf32>,
    %c0_18 = arith.constant 0 : index
    %c0_19 = arith.constant 0 : index
    %36 = vector.load %arg6[%c0_18, %c0_19] : memref<128x1xf32, #tpu.memory_space<vmem>>, vector<128x1xf32>
    tpu.vector_store %arg6[%c0_18, %c0_19], %14 {strides = array<i32>} : memref<128x1xf32, #tpu.memory_space<vmem>>, vector<128x1xf32>,
    %c0_i32_20 = arith.constant 0 : i32
    %37 = arith.cmpi eq, %arg1, %c0_i32_20 : i32
    %38 = arith.extui %37 : i1 to i32
    %c0_i32_21 = arith.constant 0 : i32
    %39 = arith.cmpi ne, %38, %c0_i32_21 : i32
    scf.if %39 {
      %c0_22 = arith.constant 0 : index
      %c0_23 = arith.constant 0 : index
      %40 = vector.load %arg5[%c0_22, %c0_23] : memref<128x32xf32, #tpu.memory_space<vmem>>, vector<128x32xf32>
      %c0_24 = arith.constant 0 : index
      %c0_25 = arith.constant 0 : index
      %41 = vector.load %arg7[%c0_24, %c0_25] : memref<128x1xf32, #tpu.memory_space<vmem>>, vector<128x1xf32>
      %42 = tpu.reciprocal %41 : vector<128x1xf32> -> vector<128x1xf32>
      %43 = vector.broadcast %42 : vector<128x1xf32> to vector<128x32xf32>
      %44 = arith.mulf %40, %43 : vector<128x32xf32>
      %c0_26 = arith.constant 0 : index
      %c0_27 = arith.constant 0 : index
      %45 = vector.load %arg5[%c0_26, %c0_27] : memref<128x32xf32, #tpu.memory_space<vmem>>, vector<128x32xf32>
      tpu.vector_store %arg5[%c0_26, %c0_27], %44 {strides = array<i32>} : memref<128x32xf32, #tpu.memory_space<vmem>>, vector<128x32xf32>,
    } else {
    }
    return
  }
  func.func @transform_0(%arg0: i32, %arg1: i32) -> (i32, i32) {
    %c0_i32 = arith.constant 0 : i32
    %c0_i32_0 = arith.constant 0 : i32
    return %arg0, %c0_i32 : i32, i32
  }
  func.func @transform_1(%arg0: i32, %arg1: i32) -> (i32, i32) {
    %c0_i32 = arith.constant 0 : i32
    %c0_i32_0 = arith.constant 0 : i32
    return %c0_i32, %arg1 : i32, i32
  }
  func.func @transform_2(%arg0: i32, %arg1: i32) -> (i32, i32) {
    %c0_i32 = arith.constant 0 : i32
    %c0_i32_0 = arith.constant 0 : i32
    %c0_i32_1 = arith.constant 0 : i32
    return %c0_i32, %c0_i32_0 : i32, i32
  }
  func.func @transform_3(%arg0: i32, %arg1: i32) -> (i32, i32) {
    %c0_i32 = arith.constant 0 : i32
    %c0_i32_0 = arith.constant 0 : i32
    return %arg0, %c0_i32 : i32, i32
  }
}

</mosaic_0001>

<llo_original>
// kernel: tpu_custom_call.1
$region0: #{tpu_custom_call.1}
  #allocation0 [shape = 'u32[]', space=smem, size = 0x4, offset = 0x4, fixed_abs, tag = 'smem constant byte address 0x4 - core index']
  #allocation1 [shape = 'u32[144,128]{1,0:T(1,128)}', space=vmem, size = 0x12000, scoped, tag = 'internal scratch']
  #allocation2 [shape = 'f32[128,1]{1,0:T(8,128)}', space=vmem, size = 0x10000, scoped, tag = 'scratch operand']
  #allocation3 [shape = 'f32[128,1]{1,0:T(8,128)}', space=vmem, size = 0x10000, scoped, tag = 'scratch operand']
  %s0 = inlined_call_operand.vmem [shape: f32[128,1], index: 0, kind: input, shape index: {}]
  %s1 = inlined_call_operand.vmem [shape: f32[1,128], index: 1, kind: input, shape index: {}]
  %s2 = inlined_call_operand.vmem [shape: f32[128,32], index: 2, kind: input, shape index: {}]
  %s3 = inlined_call_operand.vmem [shape: f32[128,32], index: 3, kind: output, shape index: {}]
  %s4 = sld [smem:[#allocation0]]
  $region30: #{tpu_custom_call.1} parent=0
    _
  %s6 = ssub.s32 1, %s4
  %s7 = scalar_select 0, %s6, %s4
  // Predicated region
  $region2: #{tpu_custom_call.1} parent=0 // pred_check
    _
  $region3: #{tpu_custom_call.1} parent=0 // pred_check_branch
    %9 = sbr.rel (0) target = $region5
  $region4: #{tpu_custom_call.1} parent=0 // pred_region
    _
  $region5: #{tpu_custom_call.1} parent=0 // pred_fallthru
    _
  // Predicated region
  $region6: #{tpu_custom_call.1} parent=0 // pred_check
    _
  $region7: #{tpu_custom_call.1} parent=0 // pred_check_branch
    %11 = sbr.rel (0) target = $region9
  $region8: #{tpu_custom_call.1} parent=0 // pred_region
    _
  $region9: #{tpu_custom_call.1} parent=0 // pred_fallthru
    _
  // Predicated region
  $region10: #{tpu_custom_call.1} parent=0 // pred_check
    _
  $region11: #{tpu_custom_call.1} parent=0 // pred_check_branch
    %13 = sbr.rel (0) target = $region13
  $region12: #{tpu_custom_call.1} parent=0 // pred_region
    _
  $region13: #{tpu_custom_call.1} parent=0 // pred_fallthru
    _
  %p14 = scmp.eq.s32.totalorder 0, 0
  // Predicated region
  $region14: #{tpu_custom_call.1} parent=0 // pred_check
    %p15 = pneg %p14
  $region15: #{tpu_custom_call.1} parent=0 // pred_check_branch
    %17 = sbr.rel (%p15) target = $region17
  $region16: #{tpu_custom_call.1} parent=0 // pred_region
    %vm18 = vcmask 7168
    %19 = vst.msk [vmem:[#allocation2] sm:$0xff] %vm18, -inf
    %20 = vst.msk [vmem:[#allocation2 + $0x8] sm:$0xff] %vm18, -inf
    %21 = vst.msk [vmem:[#allocation2 + $0x10] sm:$0xff] %vm18, -inf
    %22 = vst.msk [vmem:[#allocation2 + $0x18] sm:$0xff] %vm18, -inf
    %23 = vst.msk [vmem:[#allocation2 + $0x20] sm:$0xff] %vm18, -inf
    %24 = vst.msk [vmem:[#allocation2 + $0x28] sm:$0xff] %vm18, -inf
    %25 = vst.msk [vmem:[#allocation2 + $0x30] sm:$0xff] %vm18, -inf
    %26 = vst.msk [vmem:[#allocation2 + $0x38] sm:$0xff] %vm18, -inf
    %27 = vst.msk [vmem:[#allocation2 + $0x40] sm:$0xff] %vm18, -inf
    %28 = vst.msk [vmem:[#allocation2 + $0x48] sm:$0xff] %vm18, -inf
    %29 = vst.msk [vmem:[#allocation2 + $0x50] sm:$0xff] %vm18, -inf
    %30 = vst.msk [vmem:[#allocation2 + $0x58] sm:$0xff] %vm18, -inf
    %31 = vst.msk [vmem:[#allocation2 + $0x60] sm:$0xff] %vm18, -inf
    %32 = vst.msk [vmem:[#allocation2 + $0x68] sm:$0xff] %vm18, -inf
    %33 = vst.msk [vmem:[#allocation2 + $0x70] sm:$0xff] %vm18, -inf
    %34 = vst.msk [vmem:[#allocation2 + $0x78] sm:$0xff] %vm18, -inf
    %35 = vst.msk [vmem:[#allocation3] sm:$0xff] %vm18, 0.0
    %36 = vst.msk [vmem:[#allocation3 + $0x8] sm:$0xff] %vm18, 0.0
    %37 = vst.msk [vmem:[#allocation3 + $0x10] sm:$0xff] %vm18, 0.0
    %38 = vst.msk [vmem:[#allocation3 + $0x18] sm:$0xff] %vm18, 0.0
    %39 = vst.msk [vmem:[#allocation3 + $0x20] sm:$0xff] %vm18, 0.0
    %40 = vst.msk [vmem:[#allocation3 + $0x28] sm:$0xff] %vm18, 0.0
    %41 = vst.msk [vmem:[#allocation3 + $0x30] sm:$0xff] %vm18, 0.0
    %42 = vst.msk [vmem:[#allocation3 + $0x38] sm:$0xff] %vm18, 0.0
    %43 = vst.msk [vmem:[#allocation3 + $0x40] sm:$0xff] %vm18, 0.0
    %44 = vst.msk [vmem:[#allocation3 + $0x48] sm:$0xff] %vm18, 0.0
    %45 = vst.msk [vmem:[#allocation3 + $0x50] sm:$0xff] %vm18, 0.0
    %46 = vst.msk [vmem:[#allocation3 + $0x58] sm:$0xff] %vm18, 0.0
    %47 = vst.msk [vmem:[#allocation3 + $0x60] sm:$0xff] %vm18, 0.0
    %48 = vst.msk [vmem:[#allocation3 + $0x68] sm:$0xff] %vm18, 0.0
    %49 = vst.msk [vmem:[#allocation3 + $0x70] sm:$0xff] %vm18, 0.0
    %50 = vst.msk [vmem:[#allocation3 + $0x78] sm:$0xff] %vm18, 0.0
    %vm51 = vcmask 261120
    %52 = vst.msk [vmem:[%s3] sm:$0xff] %vm51, 0.0
    %53 = vst.msk [vmem:[%s3 + $0x8] sm:$0xff] %vm51, 0.0
    %54 = vst.msk [vmem:[%s3 + $0x10] sm:$0xff] %vm51, 0.0
    %55 = vst.msk [vmem:[%s3 + $0x18] sm:$0xff] %vm51, 0.0
    %56 = vst.msk [vmem:[%s3 + $0x20] sm:$0xff] %vm51, 0.0
    %57 = vst.msk [vmem:[%s3 + $0x28] sm:$0xff] %vm51, 0.0
    %58 = vst.msk [vmem:[%s3 + $0x30] sm:$0xff] %vm51, 0.0
    %59 = vst.msk [vmem:[%s3 + $0x38] sm:$0xff] %vm51, 0.0
    %60 = vst.msk [vmem:[%s3 + $0x40] sm:$0xff] %vm51, 0.0
    %61 = vst.msk [vmem:[%s3 + $0x48] sm:$0xff] %vm51, 0.0
    %62 = vst.msk [vmem:[%s3 + $0x50] sm:$0xff] %vm51, 0.0
    %63 = vst.msk [vmem:[%s3 + $0x58] sm:$0xff] %vm51, 0.0
    %64 = vst.msk [vmem:[%s3 + $0x60] sm:$0xff] %vm51, 0.0
    %65 = vst.msk [vmem:[%s3 + $0x68] sm:$0xff] %vm51, 0.0
    %66 = vst.msk [vmem:[%s3 + $0x70] sm:$0xff] %vm51, 0.0
    %67 = vst.msk [vmem:[%s3 + $0x78] sm:$0xff] %vm51, 0.0
  $region17: #{tpu_custom_call.1} parent=0 // pred_fallthru
    _
  %v68 = vld [vmem:[%s0] sm:$0xff]
  %v69 = vld [vmem:[%s0 + $0x8] sm:$0xff]
  %v70 = vld [vmem:[%s0 + $0x10] sm:$0xff]
  %v71 = vld [vmem:[%s0 + $0x18] sm:$0xff]
  %v72 = vld [vmem:[%s0 + $0x20] sm:$0xff]
  %v73 = vld [vmem:[%s0 + $0x28] sm:$0xff]
  %v74 = vld [vmem:[%s0 + $0x30] sm:$0xff]
  %v75 = vld [vmem:[%s0 + $0x38] sm:$0xff]
  %v76 = vld [vmem:[%s0 + $0x40] sm:$0xff]
  %v77 = vld [vmem:[%s0 + $0x48] sm:$0xff]
  %v78 = vld [vmem:[%s0 + $0x50] sm:$0xff]
  %v79 = vld [vmem:[%s0 + $0x58] sm:$0xff]
  %v80 = vld [vmem:[%s0 + $0x60] sm:$0xff]
  %v81 = vld [vmem:[%s0 + $0x68] sm:$0xff]
  %v82 = vld [vmem:[%s0 + $0x70] sm:$0xff]
  %v83 = vld [vmem:[%s0 + $0x78] sm:$0xff]
  %v84 = vld [vmem:[%s1] sm:$0x1]
  %86 = vset.pattern.permute.xlu0 0
  %87 = vperm.xlu0 %86, %v68
  %v88 = vpop.permute.xlu0 %87
  %91 = vset.pattern.permute.xlu0 0
  %92 = vperm.xlu0 %91, %v69
  %v93 = vpop.permute.xlu0 %92
  %96 = vset.pattern.permute.xlu0 0
  %97 = vperm.xlu0 %96, %v70
  %v98 = vpop.permute.xlu0 %97
  %101 = vset.pattern.permute.xlu0 0
  %102 = vperm.xlu0 %101, %v71
  %v103 = vpop.permute.xlu0 %102
  %106 = vset.pattern.permute.xlu0 0
  %107 = vperm.xlu0 %106, %v72
  %v108 = vpop.permute.xlu0 %107
  %111 = vset.pattern.permute.xlu0 0
  %112 = vperm.xlu0 %111, %v73
  %v113 = vpop.permute.xlu0 %112
  %116 = vset.pattern.permute.xlu0 0
  %117 = vperm.xlu0 %116, %v74
  %v118 = vpop.permute.xlu0 %117
  %121 = vset.pattern.permute.xlu0 0
  %122 = vperm.xlu0 %121, %v75
  %v123 = vpop.permute.xlu0 %122
  %126 = vset.pattern.permute.xlu0 0
  %127 = vperm.xlu0 %126, %v76
  %v128 = vpop.permute.xlu0 %127
  %131 = vset.pattern.permute.xlu0 0
  %132 = vperm.xlu0 %131, %v77
  %v133 = vpop.permute.xlu0 %132
  %136 = vset.pattern.permute.xlu0 0
  %137 = vperm.xlu0 %136, %v78
  %v138 = vpop.permute.xlu0 %137
  %141 = vset.pattern.permute.xlu0 0
  %142 = vperm.xlu0 %141, %v79
  %v143 = vpop.permute.xlu0 %142
  %146 = vset.pattern.permute.xlu0 0
  %147 = vperm.xlu0 %146, %v80
  %v148 = vpop.permute.xlu0 %147
  %151 = vset.pattern.permute.xlu0 0
  %152 = vperm.xlu0 %151, %v81
  %v153 = vpop.permute.xlu0 %152
  %156 = vset.pattern.permute.xlu0 0
  %157 = vperm.xlu0 %156, %v82
  %v158 = vpop.permute.xlu0 %157
  %161 = vset.pattern.permute.xlu0 0
  %162 = vperm.xlu0 %161, %v83
  %v163 = vpop.permute.xlu0 %162
  %v166 = vlaneseq
  %v167 = vshrl.u32 %v166, 7
  %v168 = vsub.s32 0, %v167
  %v169 = vrot.slane %v84, %v168
  %v171 = vadd.f32 %v88, %v169
  %v172 = vadd.f32 %v93, %v169
  %v173 = vadd.f32 %v98, %v169
  %v174 = vadd.f32 %v103, %v169
  %v175 = vadd.f32 %v108, %v169
  %v176 = vadd.f32 %v113, %v169
  %v177 = vadd.f32 %v118, %v169
  %v178 = vadd.f32 %v123, %v169
  %v179 = vadd.f32 %v128, %v169
  %v180 = vadd.f32 %v133, %v169
  %v181 = vadd.f32 %v138, %v169
  %v182 = vadd.f32 %v143, %v169
  %v183 = vadd.f32 %v148, %v169
  %v184 = vadd.f32 %v153, %v169
  %v185 = vadd.f32 %v158, %v169
  %v186 = vadd.f32 %v163, %v169
  %v187 = vmul.f32 %v171, 0.01
  %v188 = vmul.f32 %v172, 0.01
  %v189 = vmul.f32 %v173, 0.01
  %v190 = vmul.f32 %v174, 0.01
  %v191 = vmul.f32 %v175, 0.01
  %v192 = vmul.f32 %v176, 0.01
  %v193 = vmul.f32 %v177, 0.01
  %v194 = vmul.f32 %v178, 0.01
  %v195 = vmul.f32 %v179, 0.01
  %v196 = vmul.f32 %v180, 0.01
  %v197 = vmul.f32 %v181, 0.01
  %v198 = vmul.f32 %v182, 0.01
  %v199 = vmul.f32 %v183, 0.01
  %v200 = vmul.f32 %v184, 0.01
  %v201 = vmul.f32 %v185, 0.01
  %v202 = vmul.f32 %v186, 0.01
  %v203 = vmax.f32 %v171, %v187
  %v204 = vmax.f32 %v172, %v188
  %v205 = vmax.f32 %v173, %v189
  %v206 = vmax.f32 %v174, %v190
  %v207 = vmax.f32 %v175, %v191
  %v208 = vmax.f32 %v176, %v192
  %v209 = vmax.f32 %v177, %v193
  %v210 = vmax.f32 %v178, %v194
  %v211 = vmax.f32 %v179, %v195
  %v212 = vmax.f32 %v180, %v196
  %v213 = vmax.f32 %v181, %v197
  %v214 = vmax.f32 %v182, %v198
  %v215 = vmax.f32 %v183, %v199
  %v216 = vmax.f32 %v184, %v200
  %v217 = vmax.f32 %v185, %v201
  %v218 = vmax.f32 %v186, %v202
  %v219 = vld [vmem:[#allocation2] sm:$0xff]
  %v220 = vld [vmem:[#allocation2 + $0x8] sm:$0xff]
  %v221 = vld [vmem:[#allocation2 + $0x10] sm:$0xff]
  %v222 = vld [vmem:[#allocation2 + $0x18] sm:$0xff]
  %v223 = vld [vmem:[#allocation2 + $0x20] sm:$0xff]
  %v224 = vld [vmem:[#allocation2 + $0x28] sm:$0xff]
  %v225 = vld [vmem:[#allocation2 + $0x30] sm:$0xff]
  %v226 = vld [vmem:[#allocation2 + $0x38] sm:$0xff]
  %v227 = vld [vmem:[#allocation2 + $0x40] sm:$0xff]
  %v228 = vld [vmem:[#allocation2 + $0x48] sm:$0xff]
  %v229 = vld [vmem:[#allocation2 + $0x50] sm:$0xff]
  %v230 = vld [vmem:[#allocation2 + $0x58] sm:$0xff]
  %v231 = vld [vmem:[#allocation2 + $0x60] sm:$0xff]
  %v232 = vld [vmem:[#allocation2 + $0x68] sm:$0xff]
  %v233 = vld [vmem:[#allocation2 + $0x70] sm:$0xff]
  %v234 = vld [vmem:[#allocation2 + $0x78] sm:$0xff]
  %235 = vmax.xlane.f32.xlu0 %v203
  %v236 = vpop.xlane.xlu0 %235
  %237 = vmax.xlane.f32.xlu0 %v204
  %v238 = vpop.xlane.xlu0 %237
  %239 = vmax.xlane.f32.xlu0 %v205
  %v240 = vpop.xlane.xlu0 %239
  %241 = vmax.xlane.f32.xlu0 %v206
  %v242 = vpop.xlane.xlu0 %241
  %243 = vmax.xlane.f32.xlu0 %v207
  %v244 = vpop.xlane.xlu0 %243
  %245 = vmax.xlane.f32.xlu0 %v208
  %v246 = vpop.xlane.xlu0 %245
  %247 = vmax.xlane.f32.xlu0 %v209
  %v248 = vpop.xlane.xlu0 %247
  %249 = vmax.xlane.f32.xlu0 %v210
  %v250 = vpop.xlane.xlu0 %249
  %251 = vmax.xlane.f32.xlu0 %v211
  %v252 = vpop.xlane.xlu0 %251
  %253 = vmax.xlane.f32.xlu0 %v212
  %v254 = vpop.xlane.xlu0 %253
  %255 = vmax.xlane.f32.xlu0 %v213
  %v256 = vpop.xlane.xlu0 %255
  %257 = vmax.xlane.f32.xlu0 %v214
  %v258 = vpop.xlane.xlu0 %257
  %259 = vmax.xlane.f32.xlu0 %v215
  %v260 = vpop.xlane.xlu0 %259
  %261 = vmax.xlane.f32.xlu0 %v216
  %v262 = vpop.xlane.xlu0 %261
  %263 = vmax.xlane.f32.xlu0 %v217
  %v264 = vpop.xlane.xlu0 %263
  %265 = vmax.xlane.f32.xlu0 %v218
  %v266 = vpop.xlane.xlu0 %265
  %v267 = vmax.f32 %v219, %v236
  %v268 = vmax.f32 %v220, %v238
  %v269 = vmax.f32 %v221, %v240
  %v270 = vmax.f32 %v222, %v242
  %v271 = vmax.f32 %v223, %v244
  %v272 = vmax.f32 %v224, %v246
  %v273 = vmax.f32 %v225, %v248
  %v274 = vmax.f32 %v226, %v250
  %v275 = vmax.f32 %v227, %v252
  %v276 = vmax.f32 %v228, %v254
  %v277 = vmax.f32 %v229, %v256
  %v278 = vmax.f32 %v230, %v258
  %v279 = vmax.f32 %v231, %v260
  %v280 = vmax.f32 %v232, %v262
  %v281 = vmax.f32 %v233, %v264
  %v282 = vmax.f32 %v234, %v266
  %v283 = vsub.f32 %v219, %v267
  %v284 = vsub.f32 %v220, %v268
  %v285 = vsub.f32 %v221, %v269
  %v286 = vsub.f32 %v222, %v270
  %v287 = vsub.f32 %v223, %v271
  %v288 = vsub.f32 %v224, %v272
  %v289 = vsub.f32 %v225, %v273
  %v290 = vsub.f32 %v226, %v274
  %v291 = vsub.f32 %v227, %v275
  %v292 = vsub.f32 %v228, %v276
  %v293 = vsub.f32 %v229, %v277
  %v294 = vsub.f32 %v230, %v278
  %v295 = vsub.f32 %v231, %v279
  %v296 = vsub.f32 %v232, %v280
  %v297 = vsub.f32 %v233, %v281
  %v298 = vsub.f32 %v234, %v282
  %v299 = vmul.f32 %v283, 1.442695
  %v300 = vpow.pop %v299
  %v301 = vmul.f32 %v284, 1.442695
  %v302 = vpow.pop %v301
  %v303 = vmul.f32 %v285, 1.442695
  %v304 = vpow.pop %v303
  %v305 = vmul.f32 %v286, 1.442695
  %v306 = vpow.pop %v305
  %v307 = vmul.f32 %v287, 1.442695
  %v308 = vpow.pop %v307
  %v309 = vmul.f32 %v288, 1.442695
  %v310 = vpow.pop %v309
  %v311 = vmul.f32 %v289, 1.442695
  %v312 = vpow.pop %v311
  %v313 = vmul.f32 %v290, 1.442695
  %v314 = vpow.pop %v313
  %v315 = vmul.f32 %v291, 1.442695
  %v316 = vpow.pop %v315
  %v317 = vmul.f32 %v292, 1.442695
  %v318 = vpow.pop %v317
  %v319 = vmul.f32 %v293, 1.442695
  %v320 = vpow.pop %v319
  %v321 = vmul.f32 %v294, 1.442695
  %v322 = vpow.pop %v321
  %v323 = vmul.f32 %v295, 1.442695
  %v324 = vpow.pop %v323
  %v325 = vmul.f32 %v296, 1.442695
  %v326 = vpow.pop %v325
  %v327 = vmul.f32 %v297, 1.442695
  %v328 = vpow.pop %v327
  %v329 = vmul.f32 %v298, 1.442695
  %v330 = vpow.pop %v329
  %332 = vset.pattern.permute.xlu0 0
  %333 = vperm.xlu0 %332, %v267
  %v334 = vpop.permute.xlu0 %333
  %337 = vset.pattern.permute.xlu0 0
  %338 = vperm.xlu0 %337, %v268
  %v339 = vpop.permute.xlu0 %338
  %342 = vset.pattern.permute.xlu0 0
  %343 = vperm.xlu0 %342, %v269
  %v344 = vpop.permute.xlu0 %343
  %347 = vset.pattern.permute.xlu0 0
  %348 = vperm.xlu0 %347, %v270
  %v349 = vpop.permute.xlu0 %348
  %352 = vset.pattern.permute.xlu0 0
  %353 = vperm.xlu0 %352, %v271
  %v354 = vpop.permute.xlu0 %353
  %357 = vset.pattern.permute.xlu0 0
  %358 = vperm.xlu0 %357, %v272
  %v359 = vpop.permute.xlu0 %358
  %362 = vset.pattern.permute.xlu0 0
  %363 = vperm.xlu0 %362, %v273
  %v364 = vpop.permute.xlu0 %363
  %367 = vset.pattern.permute.xlu0 0
  %368 = vperm.xlu0 %367, %v274
  %v369 = vpop.permute.xlu0 %368
  %372 = vset.pattern.permute.xlu0 0
  %373 = vperm.xlu0 %372, %v275
  %v374 = vpop.permute.xlu0 %373
  %377 = vset.pattern.permute.xlu0 0
  %378 = vperm.xlu0 %377, %v276
  %v379 = vpop.permute.xlu0 %378
  %382 = vset.pattern.permute.xlu0 0
  %383 = vperm.xlu0 %382, %v277
  %v384 = vpop.permute.xlu0 %383
  %387 = vset.pattern.permute.xlu0 0
  %388 = vperm.xlu0 %387, %v278
  %v389 = vpop.permute.xlu0 %388
  %392 = vset.pattern.permute.xlu0 0
  %393 = vperm.xlu0 %392, %v279
  %v394 = vpop.permute.xlu0 %393
  %397 = vset.pattern.permute.xlu0 0
  %398 = vperm.xlu0 %397, %v280
  %v399 = vpop.permute.xlu0 %398
  %402 = vset.pattern.permute.xlu0 0
  %403 = vperm.xlu0 %402, %v281
  %v404 = vpop.permute.xlu0 %403
  %407 = vset.pattern.permute.xlu0 0
  %408 = vperm.xlu0 %407, %v282
  %v409 = vpop.permute.xlu0 %408
  %v411 = vsub.f32 %v203, %v334
  %v412 = vsub.f32 %v204, %v339
  %v413 = vsub.f32 %v205, %v344
  %v414 = vsub.f32 %v206, %v349
  %v415 = vsub.f32 %v207, %v354
  %v416 = vsub.f32 %v208, %v359
  %v417 = vsub.f32 %v209, %v364
  %v418 = vsub.f32 %v210, %v369
  %v419 = vsub.f32 %v211, %v374
  %v420 = vsub.f32 %v212, %v379
  %v421 = vsub.f32 %v213, %v384
  %v422 = vsub.f32 %v214, %v389
  %v423 = vsub.f32 %v215, %v394
  %v424 = vsub.f32 %v216, %v399
  %v425 = vsub.f32 %v217, %v404
  %v426 = vsub.f32 %v218, %v409
  %v427 = vmul.f32 %v411, 1.442695
  %v428 = vpow.pop %v427
  %v429 = vmul.f32 %v412, 1.442695
  %v430 = vpow.pop %v429
  %v431 = vmul.f32 %v413, 1.442695
  %v432 = vpow.pop %v431
  %v433 = vmul.f32 %v414, 1.442695
  %v434 = vpow.pop %v433
  %v435 = vmul.f32 %v415, 1.442695
  %v436 = vpow.pop %v435
  %v437 = vmul.f32 %v416, 1.442695
  %v438 = vpow.pop %v437
  %v439 = vmul.f32 %v417, 1.442695
  %v440 = vpow.pop %v439
  %v441 = vmul.f32 %v418, 1.442695
  %v442 = vpow.pop %v441
  %v443 = vmul.f32 %v419, 1.442695
  %v444 = vpow.pop %v443
  %v445 = vmul.f32 %v420, 1.442695
  %v446 = vpow.pop %v445
  %v447 = vmul.f32 %v421, 1.442695
  %v448 = vpow.pop %v447
  %v449 = vmul.f32 %v422, 1.442695
  %v450 = vpow.pop %v449
  %v451 = vmul.f32 %v423, 1.442695
  %v452 = vpow.pop %v451
  %v453 = vmul.f32 %v424, 1.442695
  %v454 = vpow.pop %v453
  %v455 = vmul.f32 %v425, 1.442695
  %v456 = vpow.pop %v455
  %v457 = vmul.f32 %v426, 1.442695
  %v458 = vpow.pop %v457
  %v459 = vld [vmem:[#allocation3] sm:$0xff]
  %v460 = vld [vmem:[#allocation3 + $0x8] sm:$0xff]
  %v461 = vld [vmem:[#allocation3 + $0x10] sm:$0xff]
  %v462 = vld [vmem:[#allocation3 + $0x18] sm:$0xff]
  %v463 = vld [vmem:[#allocation3 + $0x20] sm:$0xff]
  %v464 = vld [vmem:[#allocation3 + $0x28] sm:$0xff]
  %v465 = vld [vmem:[#allocation3 + $0x30] sm:$0xff]
  %v466 = vld [vmem:[#allocation3 + $0x38] sm:$0xff]
  %v467 = vld [vmem:[#allocation3 + $0x40] sm:$0xff]
  %v468 = vld [vmem:[#allocation3 + $0x48] sm:$0xff]
  %v469 = vld [vmem:[#allocation3 + $0x50] sm:$0xff]
  %v470 = vld [vmem:[#allocation3 + $0x58] sm:$0xff]
  %v471 = vld [vmem:[#allocation3 + $0x60] sm:$0xff]
  %v472 = vld [vmem:[#allocation3 + $0x68] sm:$0xff]
  %v473 = vld [vmem:[#allocation3 + $0x70] sm:$0xff]
  %v474 = vld [vmem:[#allocation3 + $0x78] sm:$0xff]
  %v475 = vmul.f32 %v300, %v459
  %v476 = vmul.f32 %v302, %v460
  %v477 = vmul.f32 %v304, %v461
  %v478 = vmul.f32 %v306, %v462
  %v479 = vmul.f32 %v308, %v463
  %v480 = vmul.f32 %v310, %v464
  %v481 = vmul.f32 %v312, %v465
  %v482 = vmul.f32 %v314, %v466
  %v483 = vmul.f32 %v316, %v467
  %v484 = vmul.f32 %v318, %v468
  %v485 = vmul.f32 %v320, %v469
  %v486 = vmul.f32 %v322, %v470
  %v487 = vmul.f32 %v324, %v471
  %v488 = vmul.f32 %v326, %v472
  %v489 = vmul.f32 %v328, %v473
  %v490 = vmul.f32 %v330, %v474
  %491 = vadd.xlane.f32.xlu0 %v428
  %v492 = vpop.xlane.xlu0 %491
  %493 = vadd.xlane.f32.xlu0 %v430
  %v494 = vpop.xlane.xlu0 %493
  %495 = vadd.xlane.f32.xlu0 %v432
  %v496 = vpop.xlane.xlu0 %495
  %497 = vadd.xlane.f32.xlu0 %v434
  %v498 = vpop.xlane.xlu0 %497
  %499 = vadd.xlane.f32.xlu0 %v436
  %v500 = vpop.xlane.xlu0 %499
  %501 = vadd.xlane.f32.xlu0 %v438
  %v502 = vpop.xlane.xlu0 %501
  %503 = vadd.xlane.f32.xlu0 %v440
  %v504 = vpop.xlane.xlu0 %503
  %505 = vadd.xlane.f32.xlu0 %v442
  %v506 = vpop.xlane.xlu0 %505
  %507 = vadd.xlane.f32.xlu0 %v444
  %v508 = vpop.xlane.xlu0 %507
  %509 = vadd.xlane.f32.xlu0 %v446
  %v510 = vpop.xlane.xlu0 %509
  %511 = vadd.xlane.f32.xlu0 %v448
  %v512 = vpop.xlane.xlu0 %511
  %513 = vadd.xlane.f32.xlu0 %v450
  %v514 = vpop.xlane.xlu0 %513
  %515 = vadd.xlane.f32.xlu0 %v452
  %v516 = vpop.xlane.xlu0 %515
  %517 = vadd.xlane.f32.xlu0 %v454
  %v518 = vpop.xlane.xlu0 %517
  %519 = vadd.xlane.f32.xlu0 %v456
  %v520 = vpop.xlane.xlu0 %519
  %521 = vadd.xlane.f32.xlu0 %v458
  %v522 = vpop.xlane.xlu0 %521
  %v523 = vadd.f32 %v475, %v492
  %v524 = vadd.f32 %v476, %v494
  %v525 = vadd.f32 %v477, %v496
  %v526 = vadd.f32 %v478, %v498
  %v527 = vadd.f32 %v479, %v500
  %v528 = vadd.f32 %v480, %v502
  %v529 = vadd.f32 %v481, %v504
  %v530 = vadd.f32 %v482, %v506
  %v531 = vadd.f32 %v483, %v508
  %v532 = vadd.f32 %v484, %v510
  %v533 = vadd.f32 %v485, %v512
  %v534 = vadd.f32 %v486, %v514
  %v535 = vadd.f32 %v487, %v516
  %v536 = vadd.f32 %v488, %v518
  %v537 = vadd.f32 %v489, %v520
  %v538 = vadd.f32 %v490, %v522
  %vm539 = vcmask 7168
  %540 = vst.msk [vmem:[#allocation3] sm:$0xff] %vm539, %v523
  %541 = vst.msk [vmem:[#allocation3 + $0x8] sm:$0xff] %vm539, %v524
  %542 = vst.msk [vmem:[#allocation3 + $0x10] sm:$0xff] %vm539, %v525
  %543 = vst.msk [vmem:[#allocation3 + $0x18] sm:$0xff] %vm539, %v526
  %544 = vst.msk [vmem:[#allocation3 + $0x20] sm:$0xff] %vm539, %v527
  %545 = vst.msk [vmem:[#allocation3 + $0x28] sm:$0xff] %vm539, %v528
  %546 = vst.msk [vmem:[#allocation3 + $0x30] sm:$0xff] %vm539, %v529
  %547 = vst.msk [vmem:[#allocation3 + $0x38] sm:$0xff] %vm539, %v530
  %548 = vst.msk [vmem:[#allocation3 + $0x40] sm:$0xff] %vm539, %v531
  %549 = vst.msk [vmem:[#allocation3 + $0x48] sm:$0xff] %vm539, %v532
  %550 = vst.msk [vmem:[#allocation3 + $0x50] sm:$0xff] %vm539, %v533
  %551 = vst.msk [vmem:[#allocation3 + $0x58] sm:$0xff] %vm539, %v534
  %552 = vst.msk [vmem:[#allocation3 + $0x60] sm:$0xff] %vm539, %v535
  %553 = vst.msk [vmem:[#allocation3 + $0x68] sm:$0xff] %vm539, %v536
  %554 = vst.msk [vmem:[#allocation3 + $0x70] sm:$0xff] %vm539, %v537
  %555 = vst.msk [vmem:[#allocation3 + $0x78] sm:$0xff] %vm539, %v538
  %s556 = smul.u32 0, 128
  %s557 = scalar_lea.vmem %s2, %s556
  %v558 = vld [vmem:[%s557] sm:$0xff]
  %v559 = vld [vmem:[%s557 + $0x8] sm:$0xff]
  %v560 = vld [vmem:[%s557 + $0x10] sm:$0xff]
  %v561 = vld [vmem:[%s557 + $0x18] sm:$0xff]
  %v562 = vld [vmem:[%s557 + $0x20] sm:$0xff]
  %v563 = vld [vmem:[%s557 + $0x28] sm:$0xff]
  %v564 = vld [vmem:[%s557 + $0x30] sm:$0xff]
  %v565 = vld [vmem:[%s557 + $0x38] sm:$0xff]
  %v566 = vld [vmem:[%s557 + $0x40] sm:$0xff]
  %v567 = vld [vmem:[%s557 + $0x48] sm:$0xff]
  %v568 = vld [vmem:[%s557 + $0x50] sm:$0xff]
  %v569 = vld [vmem:[%s557 + $0x58] sm:$0xff]
  %v570 = vld [vmem:[%s557 + $0x60] sm:$0xff]
  %v571 = vld [vmem:[%s557 + $0x68] sm:$0xff]
  %v572 = vld [vmem:[%s557 + $0x70] sm:$0xff]
  %v573 = vld [vmem:[%s557 + $0x78] sm:$0xff]
  %v574 = vld [vmem:[%s3] sm:$0xff]
  %v575 = vld [vmem:[%s3 + $0x8] sm:$0xff]
  %v576 = vld [vmem:[%s3 + $0x10] sm:$0xff]
  %v577 = vld [vmem:[%s3 + $0x18] sm:$0xff]
  %v578 = vld [vmem:[%s3 + $0x20] sm:$0xff]
  %v579 = vld [vmem:[%s3 + $0x28] sm:$0xff]
  %v580 = vld [vmem:[%s3 + $0x30] sm:$0xff]
  %v581 = vld [vmem:[%s3 + $0x38] sm:$0xff]
  %v582 = vld [vmem:[%s3 + $0x40] sm:$0xff]
  %v583 = vld [vmem:[%s3 + $0x48] sm:$0xff]
  %v584 = vld [vmem:[%s3 + $0x50] sm:$0xff]
  %v585 = vld [vmem:[%s3 + $0x58] sm:$0xff]
  %v586 = vld [vmem:[%s3 + $0x60] sm:$0xff]
  %v587 = vld [vmem:[%s3 + $0x68] sm:$0xff]
  %v588 = vld [vmem:[%s3 + $0x70] sm:$0xff]
  %v589 = vld [vmem:[%s3 + $0x78] sm:$0xff]
  %591 = vset.pattern.permute.xlu0 0
  %592 = vperm.xlu0 %591, %v300
  %v593 = vpop.permute.xlu0 %592
  %596 = vset.pattern.permute.xlu0 0
  %597 = vperm.xlu0 %596, %v302
  %v598 = vpop.permute.xlu0 %597
  %601 = vset.pattern.permute.xlu0 0
  %602 = vperm.xlu0 %601, %v304
  %v603 = vpop.permute.xlu0 %602
  %606 = vset.pattern.permute.xlu0 0
  %607 = vperm.xlu0 %606, %v306
  %v608 = vpop.permute.xlu0 %607
  %611 = vset.pattern.permute.xlu0 0
  %612 = vperm.xlu0 %611, %v308
  %v613 = vpop.permute.xlu0 %612
  %616 = vset.pattern.permute.xlu0 0
  %617 = vperm.xlu0 %616, %v310
  %v618 = vpop.permute.xlu0 %617
  %621 = vset.pattern.permute.xlu0 0
  %622 = vperm.xlu0 %621, %v312
  %v623 = vpop.permute.xlu0 %622
  %626 = vset.pattern.permute.xlu0 0
  %627 = vperm.xlu0 %626, %v314
  %v628 = vpop.permute.xlu0 %627
  %631 = vset.pattern.permute.xlu0 0
  %632 = vperm.xlu0 %631, %v316
  %v633 = vpop.permute.xlu0 %632
  %636 = vset.pattern.permute.xlu0 0
  %637 = vperm.xlu0 %636, %v318
  %v638 = vpop.permute.xlu0 %637
  %641 = vset.pattern.permute.xlu0 0
  %642 = vperm.xlu0 %641, %v320
  %v643 = vpop.permute.xlu0 %642
  %646 = vset.pattern.permute.xlu0 0
  %647 = vperm.xlu0 %646, %v322
  %v648 = vpop.permute.xlu0 %647
  %651 = vset.pattern.permute.xlu0 0
  %652 = vperm.xlu0 %651, %v324
  %v653 = vpop.permute.xlu0 %652
  %656 = vset.pattern.permute.xlu0 0
  %657 = vperm.xlu0 %656, %v326
  %v658 = vpop.permute.xlu0 %657
  %661 = vset.pattern.permute.xlu0 0
  %662 = vperm.xlu0 %661, %v328
  %v663 = vpop.permute.xlu0 %662
  %666 = vset.pattern.permute.xlu0 0
  %667 = vperm.xlu0 %666, %v330
  %v668 = vpop.permute.xlu0 %667
  %v670 = vmul.f32 %v593, %v574
  %v671 = vmul.f32 %v598, %v575
  %v672 = vmul.f32 %v603, %v576
  %v673 = vmul.f32 %v608, %v577
  %v674 = vmul.f32 %v613, %v578
  %v675 = vmul.f32 %v618, %v579
  %v676 = vmul.f32 %v623, %v580
  %v677 = vmul.f32 %v628, %v581
  %v678 = vmul.f32 %v633, %v582
  %v679 = vmul.f32 %v638, %v583
  %v680 = vmul.f32 %v643, %v584
  %v681 = vmul.f32 %v648, %v585
  %v682 = vmul.f32 %v653, %v586
  %v683 = vmul.f32 %v658, %v587
  %v684 = vmul.f32 %v663, %v588
  %v685 = vmul.f32 %v668, %v589
  %686 = vmatprep.subr.mxu0 0.0
  %687 = vmatpush1.msra.mxu0 %v573
  %688 = vmatprep.subr.mxu0 0.0
  %689 = vmatpush1.msra.mxu0 %v572
  %690 = vmatprep.subr.mxu0 0.0
  %691 = vmatpush1.msra.mxu0 %v571
  %692 = vmatprep.subr.mxu0 0.0
  %693 = vmatpush1.msra.mxu0 %v570
  %694 = vmatprep.subr.mxu0 0.0
  %695 = vmatpush1.msra.mxu0 %v569
  %696 = vmatprep.subr.mxu0 0.0
  %697 = vmatpush1.msra.mxu0 %v568
  %698 = vmatprep.subr.mxu0 0.0
  %699 = vmatpush1.msra.mxu0 %v567
  %700 = vmatprep.subr.mxu0 0.0
  %701 = vmatpush1.msra.mxu0 %v566
  %702 = vmatprep.subr.mxu0 0.0
  %703 = vmatpush1.msra.mxu0 %v565
  %704 = vmatprep.subr.mxu0 0.0
  %705 = vmatpush1.msra.mxu0 %v564
  %706 = vmatprep.subr.mxu0 0.0
  %707 = vmatpush1.msra.mxu0 %v563
  %708 = vmatprep.subr.mxu0 0.0
  %709 = vmatpush1.msra.mxu0 %v562
  %710 = vmatprep.subr.mxu0 0.0
  %711 = vmatpush1.msra.mxu0 %v561
  %712 = vmatprep.subr.mxu0 0.0
  %713 = vmatpush1.msra.mxu0 %v560
  %714 = vmatprep.subr.mxu0 0.0
  %715 = vmatpush1.msra.mxu0 %v559
  %716 = vmatprep.subr.mxu0 0.0
  %717 = vmatpush1.msra.mxu0 %v558
  %718 = vmatprep.subr.mxu0 0.0
  %719 = vmatpush2.msra.mxu0 0.0
  %720 = vmatprep.subr.mxu0 0.0
  %721 = vmatpush2.msra.mxu0 0.0
  %722 = vmatprep.subr.mxu0 0.0
  %723 = vmatpush2.msra.mxu0 0.0
  %724 = vmatprep.subr.mxu0 0.0
  %725 = vmatpush2.msra.mxu0 0.0
  %726 = vmatprep.subr.mxu0 0.0
  %727 = vmatpush2.msra.mxu0 0.0
  %728 = vmatprep.subr.mxu0 0.0
  %729 = vmatpush2.msra.mxu0 0.0
  %730 = vmatprep.subr.mxu0 0.0
  %731 = vmatpush2.msra.mxu0 0.0
  %732 = vmatprep.subr.mxu0 0.0
  %733 = vmatpush2.msra.mxu0 0.0
  %734 = vmatprep.subr.mxu0 0.0
  %735 = vmatpush2.msra.mxu0 0.0
  %736 = vmatprep.subr.mxu0 0.0
  %737 = vmatpush2.msra.mxu0 0.0
  %738 = vmatprep.subr.mxu0 0.0
  %739 = vmatpush2.msra.mxu0 0.0
  %740 = vmatprep.subr.mxu0 0.0
  %741 = vmatpush2.msra.mxu0 0.0
  %742 = vmatprep.subr.mxu0 0.0
  %743 = vmatpush2.msra.mxu0 0.0
  %744 = vmatprep.subr.mxu0 0.0
  %745 = vmatpush2.msra.mxu0 0.0
  %746 = vmatprep.subr.mxu0 0.0
  %747 = vmatpush2.msra.mxu0 0.0
  %748 = vmatprep.subr.mxu0 0.0
  %749 = vmatpush2.msra.mxu0 0.0
  %750 = vmatprep.mubr.f32.mxu0 0.0
  %751 = vmatmul.mubr.f32.gmra.mxu0 %v428
  %v752 = vpop.f32.mrf.mxu0
  %v753 = vadd.f32 0.0, %v752
  %v754 = vpop.f32.mrf.mxu0
  %755 = vmatprep.mubr.f32.mxu0 0.0
  %756 = vmatmul.mubr.f32.gmra.mxu0 %v430
  %v757 = vpop.f32.mrf.mxu0
  %v758 = vadd.f32 0.0, %v757
  %v759 = vpop.f32.mrf.mxu0
  %760 = vmatprep.mubr.f32.mxu0 0.0
  %761 = vmatmul.mubr.f32.gmra.mxu0 %v432
  %v762 = vpop.f32.mrf.mxu0
  %v763 = vadd.f32 0.0, %v762
  %v764 = vpop.f32.mrf.mxu0
  %765 = vmatprep.mubr.f32.mxu0 0.0
  %766 = vmatmul.mubr.f32.gmra.mxu0 %v434
  %v767 = vpop.f32.mrf.mxu0
  %v768 = vadd.f32 0.0, %v767
  %v769 = vpop.f32.mrf.mxu0
  %770 = vmatprep.mubr.f32.mxu0 0.0
  %771 = vmatmul.mubr.f32.gmra.mxu0 %v436
  %v772 = vpop.f32.mrf.mxu0
  %v773 = vadd.f32 0.0, %v772
  %v774 = vpop.f32.mrf.mxu0
  %775 = vmatprep.mubr.f32.mxu0 0.0
  %776 = vmatmul.mubr.f32.gmra.mxu0 %v438
  %v777 = vpop.f32.mrf.mxu0
  %v778 = vadd.f32 0.0, %v777
  %v779 = vpop.f32.mrf.mxu0
  %780 = vmatprep.mubr.f32.mxu0 0.0
  %781 = vmatmul.mubr.f32.gmra.mxu0 %v440
  %v782 = vpop.f32.mrf.mxu0
  %v783 = vadd.f32 0.0, %v782
  %v784 = vpop.f32.mrf.mxu0
  %785 = vmatprep.mubr.f32.mxu0 0.0
  %786 = vmatmul.mubr.f32.gmra.mxu0 %v442
  %v787 = vpop.f32.mrf.mxu0
  %v788 = vadd.f32 0.0, %v787
  %v789 = vpop.f32.mrf.mxu0
  %790 = vmatprep.mubr.f32.mxu0 0.0
  %791 = vmatmul.mubr.f32.gmra.mxu0 %v444
  %v792 = vpop.f32.mrf.mxu0
  %v793 = vadd.f32 0.0, %v792
  %v794 = vpop.f32.mrf.mxu0
  %795 = vmatprep.mubr.f32.mxu0 0.0
  %796 = vmatmul.mubr.f32.gmra.mxu0 %v446
  %v797 = vpop.f32.mrf.mxu0
  %v798 = vadd.f32 0.0, %v797
  %v799 = vpop.f32.mrf.mxu0
  %800 = vmatprep.mubr.f32.mxu0 0.0
  %801 = vmatmul.mubr.f32.gmra.mxu0 %v448
  %v802 = vpop.f32.mrf.mxu0
  %v803 = vadd.f32 0.0, %v802
  %v804 = vpop.f32.mrf.mxu0
  %805 = vmatprep.mubr.f32.mxu0 0.0
  %806 = vmatmul.mubr.f32.gmra.mxu0 %v450
  %v807 = vpop.f32.mrf.mxu0
  %v808 = vadd.f32 0.0, %v807
  %v809 = vpop.f32.mrf.mxu0
  %810 = vmatprep.mubr.f32.mxu0 0.0
  %811 = vmatmul.mubr.f32.gmra.mxu0 %v452
  %v812 = vpop.f32.mrf.mxu0
  %v813 = vadd.f32 0.0, %v812
  %v814 = vpop.f32.mrf.mxu0
  %815 = vmatprep.mubr.f32.mxu0 0.0
  %816 = vmatmul.mubr.f32.gmra.mxu0 %v454
  %v817 = vpop.f32.mrf.mxu0
  %v818 = vadd.f32 0.0, %v817
  %v819 = vpop.f32.mrf.mxu0
  %820 = vmatprep.mubr.f32.mxu0 0.0
  %821 = vmatmul.mubr.f32.gmra.mxu0 %v456
  %v822 = vpop.f32.mrf.mxu0
  %v823 = vadd.f32 0.0, %v822
  %v824 = vpop.f32.mrf.mxu0
  %825 = vmatprep.mubr.f32.mxu0 0.0
  %826 = vmatmul.mubr.f32.gmra.mxu0 %v458
  %v827 = vpop.f32.mrf.mxu0
  %v828 = vadd.f32 0.0, %v827
  %v829 = vpop.f32.mrf.mxu0
  %830 = vdwg.mxu0
  %v831 = vadd.f32 %v670, %v753
  %v832 = vadd.f32 %v671, %v758
  %v833 = vadd.f32 %v672, %v763
  %v834 = vadd.f32 %v673, %v768
  %v835 = vadd.f32 %v674, %v773
  %v836 = vadd.f32 %v675, %v778
  %v837 = vadd.f32 %v676, %v783
  %v838 = vadd.f32 %v677, %v788
  %v839 = vadd.f32 %v678, %v793
  %v840 = vadd.f32 %v679, %v798
  %v841 = vadd.f32 %v680, %v803
  %v842 = vadd.f32 %v681, %v808
  %v843 = vadd.f32 %v682, %v813
  %v844 = vadd.f32 %v683, %v818
  %v845 = vadd.f32 %v684, %v823
  %v846 = vadd.f32 %v685, %v828
  %vm847 = vcmask 261120
  %848 = vst.msk [vmem:[%s3] sm:$0xff] %vm847, %v831
  %849 = vst.msk [vmem:[%s3 + $0x8] sm:$0xff] %vm847, %v832
  %850 = vst.msk [vmem:[%s3 + $0x10] sm:$0xff] %vm847, %v833
  %851 = vst.msk [vmem:[%s3 + $0x18] sm:$0xff] %vm847, %v834
  %852 = vst.msk [vmem:[%s3 + $0x20] sm:$0xff] %vm847, %v835
  %853 = vst.msk [vmem:[%s3 + $0x28] sm:$0xff] %vm847, %v836
  %854 = vst.msk [vmem:[%s3 + $0x30] sm:$0xff] %vm847, %v837
  %855 = vst.msk [vmem:[%s3 + $0x38] sm:$0xff] %vm847, %v838
  %856 = vst.msk [vmem:[%s3 + $0x40] sm:$0xff] %vm847, %v839
  %857 = vst.msk [vmem:[%s3 + $0x48] sm:$0xff] %vm847, %v840
  %858 = vst.msk [vmem:[%s3 + $0x50] sm:$0xff] %vm847, %v841
  %859 = vst.msk [vmem:[%s3 + $0x58] sm:$0xff] %vm847, %v842
  %860 = vst.msk [vmem:[%s3 + $0x60] sm:$0xff] %vm847, %v843
  %861 = vst.msk [vmem:[%s3 + $0x68] sm:$0xff] %vm847, %v844
  %862 = vst.msk [vmem:[%s3 + $0x70] sm:$0xff] %vm847, %v845
  %863 = vst.msk [vmem:[%s3 + $0x78] sm:$0xff] %vm847, %v846
  %864 = vst.msk [vmem:[#allocation2] sm:$0xff] %vm539, %v267
  %865 = vst.msk [vmem:[#allocation2 + $0x8] sm:$0xff] %vm539, %v268
  %866 = vst.msk [vmem:[#allocation2 + $0x10] sm:$0xff] %vm539, %v269
  %867 = vst.msk [vmem:[#allocation2 + $0x18] sm:$0xff] %vm539, %v270
  %868 = vst.msk [vmem:[#allocation2 + $0x20] sm:$0xff] %vm539, %v271
  %869 = vst.msk [vmem:[#allocation2 + $0x28] sm:$0xff] %vm539, %v272
  %870 = vst.msk [vmem:[#allocation2 + $0x30] sm:$0xff] %vm539, %v273
  %871 = vst.msk [vmem:[#allocation2 + $0x38] sm:$0xff] %vm539, %v274
  %872 = vst.msk [vmem:[#allocation2 + $0x40] sm:$0xff] %vm539, %v275
  %873 = vst.msk [vmem:[#allocation2 + $0x48] sm:$0xff] %vm539, %v276
  %874 = vst.msk [vmem:[#allocation2 + $0x50] sm:$0xff] %vm539, %v277
  %875 = vst.msk [vmem:[#allocation2 + $0x58] sm:$0xff] %vm539, %v278
  %876 = vst.msk [vmem:[#allocation2 + $0x60] sm:$0xff] %vm539, %v279
  %877 = vst.msk [vmem:[#allocation2 + $0x68] sm:$0xff] %vm539, %v280
  %878 = vst.msk [vmem:[#allocation2 + $0x70] sm:$0xff] %vm539, %v281
  %879 = vst.msk [vmem:[#allocation2 + $0x78] sm:$0xff] %vm539, %v282
  // Predicated region
  $region18: #{tpu_custom_call.1} parent=0 // pred_check
    %p880 = pneg %p14
  $region19: #{tpu_custom_call.1} parent=0 // pred_check_branch
    %882 = sbr.rel (%p880) target = $region21
  $region20: #{tpu_custom_call.1} parent=0 // pred_region
    %v883 = vld [vmem:[%s3] sm:$0xff]
    %v884 = vld [vmem:[%s3 + $0x8] sm:$0xff]
    %v885 = vld [vmem:[%s3 + $0x10] sm:$0xff]
    %v886 = vld [vmem:[%s3 + $0x18] sm:$0xff]
    %v887 = vld [vmem:[%s3 + $0x20] sm:$0xff]
    %v888 = vld [vmem:[%s3 + $0x28] sm:$0xff]
    %v889 = vld [vmem:[%s3 + $0x30] sm:$0xff]
    %v890 = vld [vmem:[%s3 + $0x38] sm:$0xff]
    %v891 = vld [vmem:[%s3 + $0x40] sm:$0xff]
    %v892 = vld [vmem:[%s3 + $0x48] sm:$0xff]
    %v893 = vld [vmem:[%s3 + $0x50] sm:$0xff]
    %v894 = vld [vmem:[%s3 + $0x58] sm:$0xff]
    %v895 = vld [vmem:[%s3 + $0x60] sm:$0xff]
    %v896 = vld [vmem:[%s3 + $0x68] sm:$0xff]
    %v897 = vld [vmem:[%s3 + $0x70] sm:$0xff]
    %v898 = vld [vmem:[%s3 + $0x78] sm:$0xff]
    %v899 = vld [vmem:[#allocation3] sm:$0xff]
    %v900 = vld [vmem:[#allocation3 + $0x8] sm:$0xff]
    %v901 = vld [vmem:[#allocation3 + $0x10] sm:$0xff]
    %v902 = vld [vmem:[#allocation3 + $0x18] sm:$0xff]
    %v903 = vld [vmem:[#allocation3 + $0x20] sm:$0xff]
    %v904 = vld [vmem:[#allocation3 + $0x28] sm:$0xff]
    %v905 = vld [vmem:[#allocation3 + $0x30] sm:$0xff]
    %v906 = vld [vmem:[#allocation3 + $0x38] sm:$0xff]
    %v907 = vld [vmem:[#allocation3 + $0x40] sm:$0xff]
    %v908 = vld [vmem:[#allocation3 + $0x48] sm:$0xff]
    %v909 = vld [vmem:[#allocation3 + $0x50] sm:$0xff]
    %v910 = vld [vmem:[#allocation3 + $0x58] sm:$0xff]
    %v911 = vld [vmem:[#allocation3 + $0x60] sm:$0xff]
    %v912 = vld [vmem:[#allocation3 + $0x68] sm:$0xff]
    %v913 = vld [vmem:[#allocation3 + $0x70] sm:$0xff]
    %v914 = vld [vmem:[#allocation3 + $0x78] sm:$0xff]
    %v915 = vrcp.pop %v899
    %v916 = vrcp.pop %v900
    %v917 = vrcp.pop %v901
    %v918 = vrcp.pop %v902
    %v919 = vrcp.pop %v903
    %v920 = vrcp.pop %v904
    %v921 = vrcp.pop %v905
    %v922 = vrcp.pop %v906
    %v923 = vrcp.pop %v907
    %v924 = vrcp.pop %v908
    %v925 = vrcp.pop %v909
    %v926 = vrcp.pop %v910
    %v927 = vrcp.pop %v911
    %v928 = vrcp.pop %v912
    %v929 = vrcp.pop %v913
    %v930 = vrcp.pop %v914
    %932 = vset.pattern.permute.xlu0 0
    %933 = vperm.xlu0 %932, %v915
    %v934 = vpop.permute.xlu0 %933
    %937 = vset.pattern.permute.xlu0 0
    %938 = vperm.xlu0 %937, %v916
    %v939 = vpop.permute.xlu0 %938
    %942 = vset.pattern.permute.xlu0 0
    %943 = vperm.xlu0 %942, %v917
    %v944 = vpop.permute.xlu0 %943
    %947 = vset.pattern.permute.xlu0 0
    %948 = vperm.xlu0 %947, %v918
    %v949 = vpop.permute.xlu0 %948
    %952 = vset.pattern.permute.xlu0 0
    %953 = vperm.xlu0 %952, %v919
    %v954 = vpop.permute.xlu0 %953
    %957 = vset.pattern.permute.xlu0 0
    %958 = vperm.xlu0 %957, %v920
    %v959 = vpop.permute.xlu0 %958
    %962 = vset.pattern.permute.xlu0 0
    %963 = vperm.xlu0 %962, %v921
    %v964 = vpop.permute.xlu0 %963
    %967 = vset.pattern.permute.xlu0 0
    %968 = vperm.xlu0 %967, %v922
    %v969 = vpop.permute.xlu0 %968
    %972 = vset.pattern.permute.xlu0 0
    %973 = vperm.xlu0 %972, %v923
    %v974 = vpop.permute.xlu0 %973
    %977 = vset.pattern.permute.xlu0 0
    %978 = vperm.xlu0 %977, %v924
    %v979 = vpop.permute.xlu0 %978
    %982 = vset.pattern.permute.xlu0 0
    %983 = vperm.xlu0 %982, %v925
    %v984 = vpop.permute.xlu0 %983
    %987 = vset.pattern.permute.xlu0 0
    %988 = vperm.xlu0 %987, %v926
    %v989 = vpop.permute.xlu0 %988
    %992 = vset.pattern.permute.xlu0 0
    %993 = vperm.xlu0 %992, %v927
    %v994 = vpop.permute.xlu0 %993
    %997 = vset.pattern.permute.xlu0 0
    %998 = vperm.xlu0 %997, %v928
    %v999 = vpop.permute.xlu0 %998
    %1002 = vset.pattern.permute.xlu0 0
    %1003 = vperm.xlu0 %1002, %v929
    %v1004 = vpop.permute.xlu0 %1003
    %1007 = vset.pattern.permute.xlu0 0
    %1008 = vperm.xlu0 %1007, %v930
    %v1009 = vpop.permute.xlu0 %1008
    %v1011 = vmul.f32 %v883, %v934
    %v1012 = vmul.f32 %v884, %v939
    %v1013 = vmul.f32 %v885, %v944
    %v1014 = vmul.f32 %v886, %v949
    %v1015 = vmul.f32 %v887, %v954
    %v1016 = vmul.f32 %v888, %v959
    %v1017 = vmul.f32 %v889, %v964
    %v1018 = vmul.f32 %v890, %v969
    %v1019 = vmul.f32 %v891, %v974
    %v1020 = vmul.f32 %v892, %v979
    %v1021 = vmul.f32 %v893, %v984
    %v1022 = vmul.f32 %v894, %v989
    %v1023 = vmul.f32 %v895, %v994
    %v1024 = vmul.f32 %v896, %v999
    %v1025 = vmul.f32 %v897, %v1004
    %v1026 = vmul.f32 %v898, %v1009
    %1027 = vst.msk [vmem:[%s3] sm:$0xff] %vm847, %v1011
    %1028 = vst.msk [vmem:[%s3 + $0x8] sm:$0xff] %vm847, %v1012
    %1029 = vst.msk [vmem:[%s3 + $0x10] sm:$0xff] %vm847, %v1013
    %1030 = vst.msk [vmem:[%s3 + $0x18] sm:$0xff] %vm847, %v1014
    %1031 = vst.msk [vmem:[%s3 + $0x20] sm:$0xff] %vm847, %v1015
    %1032 = vst.msk [vmem:[%s3 + $0x28] sm:$0xff] %vm847, %v1016
    %1033 = vst.msk [vmem:[%s3 + $0x30] sm:$0xff] %vm847, %v1017
    %1034 = vst.msk [vmem:[%s3 + $0x38] sm:$0xff] %vm847, %v1018
    %1035 = vst.msk [vmem:[%s3 + $0x40] sm:$0xff] %vm847, %v1019
    %1036 = vst.msk [vmem:[%s3 + $0x48] sm:$0xff] %vm847, %v1020
    %1037 = vst.msk [vmem:[%s3 + $0x50] sm:$0xff] %vm847, %v1021
    %1038 = vst.msk [vmem:[%s3 + $0x58] sm:$0xff] %vm847, %v1022
    %1039 = vst.msk [vmem:[%s3 + $0x60] sm:$0xff] %vm847, %v1023
    %1040 = vst.msk [vmem:[%s3 + $0x68] sm:$0xff] %vm847, %v1024
    %1041 = vst.msk [vmem:[%s3 + $0x70] sm:$0xff] %vm847, %v1025
    %1042 = vst.msk [vmem:[%s3 + $0x78] sm:$0xff] %vm847, %v1026
  $region21: #{tpu_custom_call.1} parent=0 // pred_fallthru
    _
  // Predicated region
  $region22: #{tpu_custom_call.1} parent=0 // pred_check
    _
  $region23: #{tpu_custom_call.1} parent=0 // pred_check_branch
    %1044 = sbr.rel (0) target = $region25
  $region24: #{tpu_custom_call.1} parent=0 // pred_region
    _
  $region25: #{tpu_custom_call.1} parent=0 // pred_fallthru
    _
  // Predicated region
  $region26: #{tpu_custom_call.1} parent=0 // pred_check
    _
  $region27: #{tpu_custom_call.1} parent=0 // pred_check_branch
    %1046 = sbr.rel (0) target = $region29
  $region28: #{tpu_custom_call.1} parent=0 // pred_region
    _
  $region29: #{tpu_custom_call.1} parent=0 // pred_fallthru
    _

</llo_original>
